<compile_context>
chip_gen: v5e
topology: v5e:2x2
jax: 0.10.0
libtpu: 0.0.40
codegen_flags: <defaults>
</compile_context>

<pallas_src>
import jax
import jax.numpy as jnp
from jax.experimental import pallas as pl
from jax.experimental.pallas import tpu as pltpu


def _round_up(x, m):
    return -(-x // m) * m


def _banded_weights(w_oihw, W, WC_pad, dtype=jnp.bfloat16):
    """Fold the kx taps + width zero-padding of a 3x3 conv into per-ky band matrices.

    Returns (3, WC_pad, WC_pad) with
      band[ky][w_in*C + ci, w_out*C + co] = w[co, ci, ky, w_in - w_out + 1]
    (zero when |w_in - w_out| > 1 or inside the lane padding).
    """
    c_out, c_in, _, _ = w_oihw.shape
    WC = W * c_in
    w_k = jnp.transpose(w_oihw.astype(jnp.float32), (2, 3, 1, 0))  # (ky, kx, Cin, Cout)
    w_in = jnp.arange(W)[:, None]
    w_out = jnp.arange(W)[None, :]
    kx = w_in - w_out + 1                                          # (W, W)
    valid = (kx >= 0) & (kx <= 2)
    kx_c = jnp.clip(kx, 0, 2)

    def per_ky(w_ky):                              # (3, Cin, Cout) indexed by kx
        blocks = w_ky[kx_c]                        # (W, W, Cin, Cout)
        blocks = jnp.where(valid[:, :, None, None], blocks, 0.0)
        return jnp.transpose(blocks, (0, 2, 1, 3)).reshape(WC, WC)

    band = jax.vmap(per_ky)(w_k)                   # (3, WC, WC)
    band = jnp.pad(band, ((0, 0), (0, WC_pad - WC), (0, WC_pad - WC)))
    return band.astype(dtype)


def _pick_batch_tile(N, Hp, target_rows=256):
    """Largest B that divides N (no zero-tail step), keeps >= 2 grid steps when
    N > 1 (v7x megacore sharding of the 'parallel' axis), and targets
    `target_rows` matmul rows per step (256 fills the v6e/v7x MXU)."""
    cap = max(1, -(-target_rows // Hp))
    if N > 1:
        cap = min(cap, N // 2)
    cap = max(1, min(cap, N))
    for b in range(cap, 0, -1):
        if N % b == 0:
            return b
    return 1


def residual_block(x_nchw, w1, b1, w2, b2):
    """x_nchw: (N, C, H, W); w*: (C, C, 3, 3); b*: (C,)  (PyTorch conventions)."""
    N, C, H, W = x_nchw.shape
    WC = W * C
    WC_pad = _round_up(WC, 128)   # lane-dense last dim (multiple of 128)
    Hp = _round_up(H, 8)          # sublane-aligned per-batch row count
    B = _pick_batch_tile(N, Hp)
    R = B * Hp                    # matmul rows per grid step

    # Activations: NCHW -> (N*Hp, W*C) slab, row/lane zero-padded, bf16 MXU operand.
    # (For production, keep the model in this NHWC slab layout across blocks to
    #  avoid the wrapper-side transpose/pad HBM passes — matters most on v5e.)
    x = jnp.transpose(x_nchw, (0, 2, 3, 1)).reshape(N, H, WC)
    x = jnp.pad(x, ((0, 0), (0, Hp - H), (0, WC_pad - WC)))
    x2d = x.reshape(N * Hp, WC_pad).astype(jnp.bfloat16)

    # Weights: per-ky banded matrices (bf16); biases tiled over W (f32, added post-acc).
    w1_band = _banded_weights(w1, W, WC_pad)
    w2_band = _banded_weights(w2, W, WC_pad)
    b1_big = jnp.pad(jnp.tile(b1.astype(jnp.float32), W), (0, WC_pad - WC)).reshape(1, WC_pad)
    b2_big = jnp.pad(jnp.tile(b2.astype(jnp.float32), W), (0, WC_pad - WC)).reshape(1, WC_pad)

    def kernel(x_ref, w1_ref, b1_ref, w2_ref, b2_ref, o_ref):
        x_b = x_ref[...]                                   # (R, WC_pad) bf16

        # Row masks: kill cross-batch / image-top/bottom contamination of the
        # ky row-shifted terms.  A handful of VPU selects riding a non-binding slot.
        h = jax.lax.broadcasted_iota(jnp.int32, (R, 1), 0) % Hp
        m_top = (h > 0).astype(jnp.float32)                # drop in[h-1] term at h == 0
        m_bot = (h < H - 1).astype(jnp.float32)            # drop in[h+1] term at h == H-1 / pad rows
        zrow = jnp.zeros((1, WC_pad), jnp.float32)

        def conv3x3(src_b, w_ref, b_ref):
            # out[h] = sum_ky in[h-1+ky] @ band[ky] + bias, as 3 full-slab MXU
            # matmuls plus result row-shifts (no activation lane/sublane slicing).
            s0 = jnp.dot(src_b, w_ref[0], preferred_element_type=jnp.float32)
            s1 = jnp.dot(src_b, w_ref[1], preferred_element_type=jnp.float32)
            s2 = jnp.dot(src_b, w_ref[2], preferred_element_type=jnp.float32)
            s0d = jnp.concatenate([zrow, s0[:-1]], axis=0)   # s0d[r] = s0[r-1]
            s2u = jnp.concatenate([s2[1:], zrow], axis=0)    # s2u[r] = s2[r+1]
            return s1 + m_top * s0d + m_bot * s2u + b_ref[...]

        t1 = jnp.maximum(conv3x3(x_b, w1_ref, b1_ref), 0.0)       # conv1 + ReLU (f32)
        t2 = conv3x3(t1.astype(jnp.bfloat16), w2_ref, b2_ref)     # conv2
        # Residual add + ReLU: one whole-slab, lane-dense store.
        o_ref[...] = jnp.maximum(x_b.astype(jnp.float32) + t2, 0.0).astype(o_ref.dtype)

    out_dtype = x_nchw.dtype
    # Explicit scoped-VMEM budget: resident weights + double-buffered blocks +
    # in-kernel temporaries, with 2x headroom; never below the default, capped at
    # v7x's 64 MiB physical VMEM.
    est = (2 * 3 * WC_pad * WC_pad * 2                        # two banded weight sets (bf16)
           + 2 * WC_pad * 4                                   # biases
           + 2 * R * WC_pad * 2                               # double-buffered bf16 input blocks
           + 2 * R * WC_pad * jnp.dtype(out_dtype).itemsize   # double-buffered output blocks
           + 10 * R * WC_pad * 4)                             # matmul results / t1 / t2 temporaries
    vmem_limit = int(min(64 * 2**20, max(32 * 2**20, 2 * est)))

    out2d = pl.pallas_call(
        kernel,
        out_shape=jax.ShapeDtypeStruct((N * Hp, WC_pad), out_dtype),
        grid=(N // B,),
        in_specs=[
            pl.BlockSpec((R, WC_pad), lambda g: (g, 0)),
            # Whole-array VMEM residents: constant across the grid -> single copy.
            pl.BlockSpec(memory_space=pltpu.MemorySpace.VMEM),
            pl.BlockSpec(memory_space=pltpu.MemorySpace.VMEM),
            pl.BlockSpec(memory_space=pltpu.MemorySpace.VMEM),
            pl.BlockSpec(memory_space=pltpu.MemorySpace.VMEM),
        ],
        out_specs=pl.BlockSpec((R, WC_pad), lambda g: (g, 0)),
        compiler_params=pltpu.CompilerParams(
            dimension_semantics=("parallel",),
            vmem_limit_bytes=vmem_limit,
        ),
    )(x2d, w1_band, b1_big, w2_band, b2_big)

    out = out2d.reshape(N, Hp, WC_pad)[:, :H, :WC].reshape(N, H, W, C)
    return jnp.transpose(out, (0, 3, 1, 2))


def _reference(x_nchw, w1, b1, w2, b2):
    dn = jax.lax.conv_dimension_numbers(x_nchw.shape, w1.shape,
                                        ("NCHW", "OIHW", "NCHW"))
    y = jax.lax.conv_general_dilated(x_nchw, w1, (1, 1), ((1, 1), (1, 1)),
                                     dimension_numbers=dn)
    y = jax.nn.relu(y + b1.reshape(1, -1, 1, 1))
    y = jax.lax.conv_general_dilated(y, w2, (1, 1), ((1, 1), (1, 1)),
                                     dimension_numbers=dn)
    y = y + b2.reshape(1, -1, 1, 1)
    return jax.nn.relu(x_nchw + y)


if __name__ == "__main__":
    key = jax.random.PRNGKey(0)
    N, C, H, W = 2, 4, 16, 16
    k_x, k_w1, k_b1, k_w2, k_b2 = jax.random.split(key, 5)

    x = jax.random.normal(k_x, (N, C, H, W), jnp.float32)

    # Deterministic init mimicking PyTorch's default uniform(-1/sqrt(fan_in), +)
    fan_in = C * 3 * 3
    bound = 1.0 / (fan_in ** 0.5)
    w1 = jax.random.uniform(k_w1, (C, C, 3, 3), jnp.float32, -bound, bound)
    b1 = jax.random.uniform(k_b1, (C,), jnp.float32, -bound, bound)
    w2 = jax.random.uniform(k_w2, (C, C, 3, 3), jnp.float32, -bound, bound)
    b2 = jax.random.uniform(k_b2, (C,), jnp.float32, -bound, bound)

    out = jax.block_until_ready(residual_block(x, w1, b1, w2, b2))
    ref = _reference(x, w1, b1, w2, b2)

    assert out.shape == (N, C, H, W)
    # bf16 MXU operands (f32 accumulation) -> loosened tolerance vs the f32 reference,
    # as flagged in the performance review.
    assert jnp.allclose(out, ref, atol=2e-2, rtol=2e-2), "Pallas output mismatch vs reference"
    print("KERNEL_OK")
</pallas_src>

<mosaic_0001>
module attributes {stable_mosaic.version = 11 : i64} {
  func.func @kernel(%arg0: i32, %arg1: memref<16x128xbf16, #tpu.memory_space<vmem>>, %arg2: memref<3x128x128xbf16, #tpu.memory_space<vmem>>, %arg3: memref<1x128xf32, #tpu.memory_space<vmem>>, %arg4: memref<3x128x128xbf16, #tpu.memory_space<vmem>>, %arg5: memref<1x128xf32, #tpu.memory_space<vmem>>, %arg6: memref<16x128xf32, #tpu.memory_space<vmem>>) attributes {dimension_semantics = [#tpu.dimension_semantics<parallel>], iteration_bounds = array<i64: 2>, scalar_prefetch = 0 : i64, scratch_operands = 0 : i64, tpu.core_type = #tpu.core_type<tc>, window_params = [{transform_indices = @transform_0, window_bounds = array<i64: 16, 128>}, {pipeline_mode = #tpu.pipeline_mode<synchronous>, transform_indices = @transform_1, window_bounds = array<i64: 3, 128, 128>}, {pipeline_mode = #tpu.pipeline_mode<synchronous>, transform_indices = @transform_2, window_bounds = array<i64: 1, 128>}, {pipeline_mode = #tpu.pipeline_mode<synchronous>, transform_indices = @transform_3, window_bounds = array<i64: 3, 128, 128>}, {pipeline_mode = #tpu.pipeline_mode<synchronous>, transform_indices = @transform_4, window_bounds = array<i64: 1, 128>}, {transform_indices = @transform_5, window_bounds = array<i64: 16, 128>}]} {
    %c0 = arith.constant 0 : index
    %c0_0 = arith.constant 0 : index
    %0 = vector.load %arg1[%c0, %c0_0] : memref<16x128xbf16, #tpu.memory_space<vmem>>, vector<16x128xbf16>
    %1 = tpu.iota {dimensions = array<i32: 0>} : vector<16x1xi32>
    %c16_i32 = arith.constant 16 : i32
    %c0_i32 = arith.constant 0 : i32
    %2 = arith.cmpi eq, %c16_i32, %c0_i32 : i32
    %c1_i32 = arith.constant 1 : i32
    %3 = arith.select %2, %c1_i32, %c16_i32 : i32
    %4 = vector.broadcast %3 : i32 to vector<16x1xi32>
    %5 = arith.remsi %1, %4 : vector<16x1xi32>
    %c0_i32_1 = arith.constant 0 : i32
    %6 = vector.broadcast %c0_i32_1 : i32 to vector<16x1xi32>
    %7 = arith.cmpi ne, %5, %6 : vector<16x1xi32>
    %c0_i32_2 = arith.constant 0 : i32
    %8 = vector.broadcast %c0_i32_2 : i32 to vector<16x1xi32>
    %9 = arith.cmpi slt, %5, %8 : vector<16x1xi32>
    %c0_i32_3 = arith.constant 0 : i32
    %10 = arith.cmpi slt, %3, %c0_i32_3 : i32
    %11 = vector.broadcast %10 : i1 to vector<16x1xi1>
    %12 = vector.broadcast %11 : vector<16x1xi1> to vector<16x1xi1>
    %13 = arith.xori %9, %12 : vector<16x1xi1>
    %14 = arith.andi %13, %7 : vector<16x1xi1>
    %15 = vector.broadcast %3 : i32 to vector<16x1xi32>
    %16 = arith.addi %5, %15 : vector<16x1xi32>
    %17 = arith.select %14, %16, %5 : vector<16x1xi1>, vector<16x1xi32>
    %c0_i32_4 = arith.constant 0 : i32
    %18 = vector.broadcast %c0_i32_4 : i32 to vector<16x1xi32>
    %19 = arith.cmpi sgt, %17, %18 : vector<16x1xi32>
    %20 = arith.extui %19 : vector<16x1xi1> to vector<16x1xi32>
    %21 = arith.sitofp %20 : vector<16x1xi32> to vector<16x1xf32>
    %c15_i32 = arith.constant 15 : i32
    %22 = vector.broadcast %c15_i32 : i32 to vector<16x1xi32>
    %23 = arith.cmpi slt, %17, %22 : vector<16x1xi32>
    %24 = arith.extui %23 : vector<16x1xi1> to vector<16x1xi32>
    %25 = arith.sitofp %24 : vector<16x1xi32> to vector<16x1xf32>
    %cst = arith.constant 0.000000e+00 : f32
    %26 = vector.broadcast %cst : f32 to vector<1x128xf32>
    %c0_5 = arith.constant 0 : index
    %c0_6 = arith.constant 0 : index
    %c0_7 = arith.constant 0 : index
    %27 = vector.load %arg2[%c0_5, %c0_6, %c0_7] : memref<3x128x128xbf16, #tpu.memory_space<vmem>>, vector<1x128x128xbf16>
    %28 = vector.shape_cast %27 : vector<1x128x128xbf16> to vector<128x128xbf16>
    %cst_8 = arith.constant dense<0.000000e+00> : vector<16x128xf32>
    %29 = tpu.matmul %0, %28, %cst_8 {dimension_numbers = #tpu.dot_dimension_numbers<[1], [0], [0], [1], [0, 0, 1, 1], [], []>} : vector<16x128xbf16>, vector<128x128xbf16>, vector<16x128xf32> -> vector<16x128xf32>
    %c1 = arith.constant 1 : index
    %c0_9 = arith.constant 0 : index
    %c0_10 = arith.constant 0 : index
    %30 = vector.load %arg2[%c1, %c0_9, %c0_10] : memref<3x128x128xbf16, #tpu.memory_space<vmem>>, vector<1x128x128xbf16>
    %31 = vector.shape_cast %30 : vector<1x128x128xbf16> to vector<128x128xbf16>
    %cst_11 = arith.constant dense<0.000000e+00> : vector<16x128xf32>
    %32 = tpu.matmul %0, %31, %cst_11 {dimension_numbers = #tpu.dot_dimension_numbers<[1], [0], [0], [1], [0, 0, 1, 1], [], []>} : vector<16x128xbf16>, vector<128x128xbf16>, vector<16x128xf32> -> vector<16x128xf32>
    %c2 = arith.constant 2 : index
    %c0_12 = arith.constant 0 : index
    %c0_13 = arith.constant 0 : index
    %33 = vector.load %arg2[%c2, %c0_12, %c0_13] : memref<3x128x128xbf16, #tpu.memory_space<vmem>>, vector<1x128x128xbf16>
    %34 = vector.shape_cast %33 : vector<1x128x128xbf16> to vector<128x128xbf16>
    %cst_14 = arith.constant dense<0.000000e+00> : vector<16x128xf32>
    %35 = tpu.matmul %0, %34, %cst_14 {dimension_numbers = #tpu.dot_dimension_numbers<[1], [0], [0], [1], [0, 0, 1, 1], [], []>} : vector<16x128xbf16>, vector<128x128xbf16>, vector<16x128xf32> -> vector<16x128xf32>
    %36 = vector.extract_strided_slice %29 {offsets = [0, 0], sizes = [15, 128], strides = [1, 1]} : vector<16x128xf32> to vector<15x128xf32>
    %37 = tpu.concatenate %26, %36 in 0 : vector<1x128xf32>, vector<15x128xf32> -> vector<16x128xf32>
    %38 = vector.extract_strided_slice %35 {offsets = [1, 0], sizes = [15, 128], strides = [1, 1]} : vector<16x128xf32> to vector<15x128xf32>
    %39 = tpu.concatenate %38, %26 in 0 : vector<15x128xf32>, vector<1x128xf32> -> vector<16x128xf32>
    %40 = vector.broadcast %21 : vector<16x1xf32> to vector<16x128xf32>
    %41 = arith.mulf %40, %37 : vector<16x128xf32>
    %42 = arith.addf %32, %41 : vector<16x128xf32>
    %43 = vector.broadcast %25 : vector<16x1xf32> to vector<16x128xf32>
    %44 = arith.mulf %43, %39 : vector<16x128xf32>
    %45 = arith.addf %42, %44 : vector<16x128xf32>
    %c0_15 = arith.constant 0 : index
    %c0_16 = arith.constant 0 : index
    %46 = vector.load %arg3[%c0_15, %c0_16] : memref<1x128xf32, #tpu.memory_space<vmem>>, vector<1x128xf32>
    %47 = vector.broadcast %46 : vector<1x128xf32> to vector<16x128xf32>
    %48 = arith.addf %45, %47 : vector<16x128xf32>
    %cst_17 = arith.constant 0.000000e+00 : f32
    %49 = vector.broadcast %cst_17 : f32 to vector<16x128xf32>
    %50 = arith.maximumf %48, %49 : vector<16x128xf32>
    %51 = arith.truncf %50 : vector<16x128xf32> to vector<16x128xbf16>
    %c0_18 = arith.constant 0 : index
    %c0_19 = arith.constant 0 : index
    %c0_20 = arith.constant 0 : index
    %52 = vector.load %arg4[%c0_18, %c0_19, %c0_20] : memref<3x128x128xbf16, #tpu.memory_space<vmem>>, vector<1x128x128xbf16>
    %53 = vector.shape_cast %52 : vector<1x128x128xbf16> to vector<128x128xbf16>
    %cst_21 = arith.constant dense<0.000000e+00> : vector<16x128xf32>
    %54 = tpu.matmul %51, %53, %cst_21 {dimension_numbers = #tpu.dot_dimension_numbers<[1], [0], [0], [1], [0, 0, 1, 1], [], []>} : vector<16x128xbf16>, vector<128x128xbf16>, vector<16x128xf32> -> vector<16x128xf32>
    %c1_22 = arith.constant 1 : index
    %c0_23 = arith.constant 0 : index
    %c0_24 = arith.constant 0 : index
    %55 = vector.load %arg4[%c1_22, %c0_23, %c0_24] : memref<3x128x128xbf16, #tpu.memory_space<vmem>>, vector<1x128x128xbf16>
    %56 = vector.shape_cast %55 : vector<1x128x128xbf16> to vector<128x128xbf16>
    %cst_25 = arith.constant dense<0.000000e+00> : vector<16x128xf32>
    %57 = tpu.matmul %51, %56, %cst_25 {dimension_numbers = #tpu.dot_dimension_numbers<[1], [0], [0], [1], [0, 0, 1, 1], [], []>} : vector<16x128xbf16>, vector<128x128xbf16>, vector<16x128xf32> -> vector<16x128xf32>
    %c2_26 = arith.constant 2 : index
    %c0_27 = arith.constant 0 : index
    %c0_28 = arith.constant 0 : index
    %58 = vector.load %arg4[%c2_26, %c0_27, %c0_28] : memref<3x128x128xbf16, #tpu.memory_space<vmem>>, vector<1x128x128xbf16>
    %59 = vector.shape_cast %58 : vector<1x128x128xbf16> to vector<128x128xbf16>
    %cst_29 = arith.constant dense<0.000000e+00> : vector<16x128xf32>
    %60 = tpu.matmul %51, %59, %cst_29 {dimension_numbers = #tpu.dot_dimension_numbers<[1], [0], [0], [1], [0, 0, 1, 1], [], []>} : vector<16x128xbf16>, vector<128x128xbf16>, vector<16x128xf32> -> vector<16x128xf32>
    %61 = vector.extract_strided_slice %54 {offsets = [0, 0], sizes = [15, 128], strides = [1, 1]} : vector<16x128xf32> to vector<15x128xf32>
    %62 = tpu.concatenate %26, %61 in 0 : vector<1x128xf32>, vector<15x128xf32> -> vector<16x128xf32>
    %63 = vector.extract_strided_slice %60 {offsets = [1, 0], sizes = [15, 128], strides = [1, 1]} : vector<16x128xf32> to vector<15x128xf32>
    %64 = tpu.concatenate %63, %26 in 0 : vector<15x128xf32>, vector<1x128xf32> -> vector<16x128xf32>
    %65 = vector.broadcast %21 : vector<16x1xf32> to vector<16x128xf32>
    %66 = arith.mulf %65, %62 : vector<16x128xf32>
    %67 = arith.addf %57, %66 : vector<16x128xf32>
    %68 = vector.broadcast %25 : vector<16x1xf32> to vector<16x128xf32>
    %69 = arith.mulf %68, %64 : vector<16x128xf32>
    %70 = arith.addf %67, %69 : vector<16x128xf32>
    %c0_30 = arith.constant 0 : index
    %c0_31 = arith.constant 0 : index
    %71 = vector.load %arg5[%c0_30, %c0_31] : memref<1x128xf32, #tpu.memory_space<vmem>>, vector<1x128xf32>
    %72 = vector.broadcast %71 : vector<1x128xf32> to vector<16x128xf32>
    %73 = arith.addf %70, %72 : vector<16x128xf32>
    %74 = arith.extf %0 : vector<16x128xbf16> to vector<16x128xf32>
    %75 = arith.addf %74, %73 : vector<16x128xf32>
    %cst_32 = arith.constant 0.000000e+00 : f32
    %76 = vector.broadcast %cst_32 : f32 to vector<16x128xf32>
    %77 = arith.maximumf %75, %76 : vector<16x128xf32>
    %c0_33 = arith.constant 0 : index
    %c0_34 = arith.constant 0 : index
    %78 = vector.load %arg6[%c0_33, %c0_34] : memref<16x128xf32, #tpu.memory_space<vmem>>, vector<16x128xf32>
    tpu.vector_store %arg6[%c0_33, %c0_34], %77 {strides = array<i32>} : memref<16x128xf32, #tpu.memory_space<vmem>>, vector<16x128xf32>,
    return
  }
  func.func @transform_0(%arg0: i32) -> (i32, i32) {
    %c0_i32 = arith.constant 0 : i32
    %c0_i32_0 = arith.constant 0 : i32
    return %arg0, %c0_i32 : i32, i32
  }
  func.func @transform_1(%arg0: i32) -> (i32, i32, i32) {
    %c0_i32 = arith.constant 0 : i32
    %c0_i32_0 = arith.constant 0 : i32
    %c0_i32_1 = arith.constant 0 : i32
    %c0_i32_2 = arith.constant 0 : i32
    return %c0_i32, %c0_i32_0, %c0_i32_1 : i32, i32, i32
  }
  func.func @transform_2(%arg0: i32) -> (i32, i32) {
    %c0_i32 = arith.constant 0 : i32
    %c0_i32_0 = arith.constant 0 : i32
    %c0_i32_1 = arith.constant 0 : i32
    return %c0_i32, %c0_i32_0 : i32, i32
  }
  func.func @transform_3(%arg0: i32) -> (i32, i32, i32) {
    %c0_i32 = arith.constant 0 : i32
    %c0_i32_0 = arith.constant 0 : i32
    %c0_i32_1 = arith.constant 0 : i32
    %c0_i32_2 = arith.constant 0 : i32
    return %c0_i32, %c0_i32_0, %c0_i32_1 : i32, i32, i32
  }
  func.func @transform_4(%arg0: i32) -> (i32, i32) {
    %c0_i32 = arith.constant 0 : i32
    %c0_i32_0 = arith.constant 0 : i32
    %c0_i32_1 = arith.constant 0 : i32
    return %c0_i32, %c0_i32_0 : i32, i32
  }
  func.func @transform_5(%arg0: i32) -> (i32, i32) {
    %c0_i32 = arith.constant 0 : i32
    %c0_i32_0 = arith.constant 0 : i32
    return %arg0, %c0_i32 : i32, i32
  }
}

</mosaic_0001>

<llo_original>
// kernel: tpu_custom_call.1
$region0: #{tpu_custom_call.1}
  #allocation0 [shape = 'u32[]', space=smem, size = 0x4, offset = 0x4, fixed_abs, tag = 'smem constant byte address 0x4 - core index']
  #allocation1 [shape = 'u32[72,128]{1,0:T(1,128)}', space=vmem, size = 0x9000, scoped, tag = 'internal scratch']
  %s0 = inlined_call_operand.hbm [shape: bf16[32,128], index: 0, kind: input, shape index: {}]
  %s1 = inlined_call_operand.hbm [shape: bf16[3,128,128], index: 1, kind: input, shape index: {}]
  %s2 = inlined_call_operand.vmem [shape: f32[1,128], index: 2, kind: input, shape index: {}]
  %s3 = inlined_call_operand.hbm [shape: bf16[3,128,128], index: 3, kind: input, shape index: {}]
  %s4 = inlined_call_operand.vmem [shape: f32[1,128], index: 4, kind: input, shape index: {}]
  %s5 = inlined_call_operand.hbm [shape: f32[32,128], index: 5, kind: output, shape index: {}]
  %s6 = sld [smem:[#allocation0]]
  $region65: #{tpu_custom_call.1} parent=0
    _
  %s8 = ssub.s32 1, %s6
  %s9 = scalar_select 0, %s8, %s6
  $region1: #{tpu_custom_call.1} parent=0
    #allocation2 [shape = 'u8[8192]{0}', space=vmem, size = 0x2000, scoped, tag = 'input window, operand 0']
    #allocation3 [shape = 's32[2]{0}', space=sflag, size = 0x8, scoped, tag = 'scoped memory for tpu_custom_call.1']
    #allocation4 [shape = 's32[2]{0}', space=sflag, size = 0x8, scoped, tag = 'scoped memory for tpu_custom_call.1']
    #allocation5 [shape = 'u8[98304]{0}', space=vmem, size = 0x18000, scoped, tag = 'input window, operand 1, single buffered']
    #allocation6 [shape = 's32[1]{0}', space=sflag, size = 0x4, scoped, tag = 'scoped memory for tpu_custom_call.1']
    #allocation7 [shape = 'u8[98304]{0}', space=vmem, size = 0x18000, scoped, tag = 'input window, operand 3, single buffered']
    #allocation8 [shape = 'u8[16384]{0}', space=vmem, size = 0x4000, scoped, tag = 'output window, operand 0']
    %10 = vsyncpa [#allocation3], 0
    %s11 = scalar_lea.sflag [#allocation3], 1
    %12 = vsyncpa %s11, 0
    %13 = vsyncpa [#allocation6], 0
    %14 = vsyncpa [#allocation4], 0
    %s15 = scalar_lea.sflag [#allocation4], 1
    %16 = vsyncpa %s15, 0
    loop: start=0, step=1, limit=4
    $region2: #{tpu_custom_call.1} parent=1 // loop_pre_header
      _
    $region3: #{tpu_custom_call.1} parent=1 // loop_header
      %s18 = sphi 0, %s22
      %p19 = scmp.ge.s32.totalorder %s18, 4
      %s28 = sphi 0, %s30
      %s31 = sphi 0, %s28
      %s32 = sphi 0, %s31
      %s48 = sphi 0, %s32
      %s52 = sphi 0, %s52
      %s54 = sphi 0, %s52
      %s55 = sphi 0, %s54
      %s69 = sphi 0, %s55
      %s73 = sphi 0, %s73
      %s75 = sphi 0, %s73
      %s76 = sphi 0, %s75
      %s90 = sphi 0, %s76
      %s94 = sphi 0, %s94
      %s96 = sphi 0, %s94
      %s97 = sphi 0, %s96
      %s111 = sphi 0, %s97
      %s115 = sphi 0, %s115
      %s117 = sphi 0, %s115
      %s118 = sphi 0, %s117
      %s132 = sphi 0, %s118
      %s138 = sphi 0, %s140
      %s141 = sphi 0, %s138
      %s142 = sphi 0, %s141
      %s158 = sphi 0, %s142
    $region4: #{tpu_custom_call.1} parent=1 // loop_header_branch
      %21 = sbr.rel (%p19) target = $region8
    $region5: #{tpu_custom_call.1} parent=1 // loop_body
      %s23 = ssub.s32 %s18, 1
      %s24 = ssub.s32 %s18, 2
      %s25 = sadd.s32 %s18, 1
      %s26 = ssub.s32 %s18, %s25
      %p27 = scmp.eq.s32.totalorder %s26, 0
      %s29 = sadd.s32 %s28, 1
      %s30 = scalar_select %p27, %s28, %s29
      %p33 = pneg %p27
      %p34 = scmp.eq.s32.totalorder %s18, 1
      %p35 = por %p33, %p34
      %p36 = scmp.ne.s32.totalorder %s28, %s31
      %p37 = scmp.eq.s32.totalorder %s18, 0
      %p38 = por %p36, %p37
      %p39 = scmp.ne.s32.totalorder %s28, %s31
      %p40 = scmp.eq.s32.totalorder %s23, 1
      %p41 = por %p39, %p40
      %p42 = scmp.ne.s32.totalorder %s31, %s32
      %p43 = scmp.eq.s32.totalorder %s23, 0
      %p44 = por %p42, %p43
      %p45 = scmp.ne.s32.totalorder %s31, %s32
      %p46 = scmp.eq.s32.totalorder %s24, 1
      %p47 = por %p45, %p46
      %p49 = scmp.ne.s32.totalorder %s32, %s48
      %p50 = scmp.eq.s32.totalorder %s24, 0
      %p51 = por %p49, %p50
      %s53 = sadd.s32 %s52, 1
      %p56 = scmp.eq.s32.totalorder %s18, 1
      %p57 = scmp.ne.s32.totalorder %s52, %s54
      %p58 = scmp.eq.s32.totalorder %s18, 0
      %p59 = por %p57, %p58
      %p60 = scmp.ne.s32.totalorder %s52, %s54
      %p61 = scmp.eq.s32.totalorder %s23, 1
      %p62 = por %p60, %p61
      %p63 = scmp.ne.s32.totalorder %s54, %s55
      %p64 = scmp.eq.s32.totalorder %s23, 0
      %p65 = por %p63, %p64
      %p66 = scmp.ne.s32.totalorder %s54, %s55
      %p67 = scmp.eq.s32.totalorder %s24, 1
      %p68 = por %p66, %p67
      %p70 = scmp.ne.s32.totalorder %s55, %s69
      %p71 = scmp.eq.s32.totalorder %s24, 0
      %p72 = por %p70, %p71
      %s74 = sadd.s32 %s73, 1
      %p77 = scmp.eq.s32.totalorder %s18, 1
      %p78 = scmp.ne.s32.totalorder %s73, %s75
      %p79 = scmp.eq.s32.totalorder %s18, 0
      %p80 = por %p78, %p79
      %p81 = scmp.ne.s32.totalorder %s73, %s75
      %p82 = scmp.eq.s32.totalorder %s23, 1
      %p83 = por %p81, %p82
      %p84 = scmp.ne.s32.totalorder %s75, %s76
      %p85 = scmp.eq.s32.totalorder %s23, 0
      %p86 = por %p84, %p85
      %p87 = scmp.ne.s32.totalorder %s75, %s76
      %p88 = scmp.eq.s32.totalorder %s24, 1
      %p89 = por %p87, %p88
      %p91 = scmp.ne.s32.totalorder %s76, %s90
      %p92 = scmp.eq.s32.totalorder %s24, 0
      %p93 = por %p91, %p92
      %s95 = sadd.s32 %s94, 1
      %p98 = scmp.eq.s32.totalorder %s18, 1
      %p99 = scmp.ne.s32.totalorder %s94, %s96
      %p100 = scmp.eq.s32.totalorder %s18, 0
      %p101 = por %p99, %p100
      %p102 = scmp.ne.s32.totalorder %s94, %s96
      %p103 = scmp.eq.s32.totalorder %s23, 1
      %p104 = por %p102, %p103
      %p105 = scmp.ne.s32.totalorder %s96, %s97
      %p106 = scmp.eq.s32.totalorder %s23, 0
      %p107 = por %p105, %p106
      %p108 = scmp.ne.s32.totalorder %s96, %s97
      %p109 = scmp.eq.s32.totalorder %s24, 1
      %p110 = por %p108, %p109
      %p112 = scmp.ne.s32.totalorder %s97, %s111
      %p113 = scmp.eq.s32.totalorder %s24, 0
      %p114 = por %p112, %p113
      %s116 = sadd.s32 %s115, 1
      %p119 = scmp.eq.s32.totalorder %s18, 1
      %p120 = scmp.ne.s32.totalorder %s115, %s117
      %p121 = scmp.eq.s32.totalorder %s18, 0
      %p122 = por %p120, %p121
      %p123 = scmp.ne.s32.totalorder %s115, %s117
      %p124 = scmp.eq.s32.totalorder %s23, 1
      %p125 = por %p123, %p124
      %p126 = scmp.ne.s32.totalorder %s117, %s118
      %p127 = scmp.eq.s32.totalorder %s23, 0
      %p128 = por %p126, %p127
      %p129 = scmp.ne.s32.totalorder %s117, %s118
      %p130 = scmp.eq.s32.totalorder %s24, 1
      %p131 = por %p129, %p130
      %p133 = scmp.ne.s32.totalorder %s118, %s132
      %p134 = scmp.eq.s32.totalorder %s24, 0
      %p135 = por %p133, %p134
      %s136 = ssub.s32 %s18, %s25
      %p137 = scmp.eq.s32.totalorder %s136, 0
      %s139 = sadd.s32 %s138, 1
      %s140 = scalar_select %p137, %s138, %s139
      %p143 = pneg %p137
      %p144 = scmp.eq.s32.totalorder %s18, 1
      %p145 = por %p143, %p144
      %p146 = scmp.ne.s32.totalorder %s138, %s141
      %p147 = scmp.eq.s32.totalorder %s18, 0
      %p148 = por %p146, %p147
      %p149 = scmp.ne.s32.totalorder %s138, %s141
      %p150 = scmp.eq.s32.totalorder %s23, 1
      %p151 = por %p149, %p150
      %p152 = scmp.ne.s32.totalorder %s141, %s142
      %p153 = scmp.eq.s32.totalorder %s23, 0
      %p154 = por %p152, %p153
      %p155 = scmp.ne.s32.totalorder %s141, %s142
      %p156 = scmp.eq.s32.totalorder %s24, 1
      %p157 = por %p155, %p156
      %p159 = scmp.ne.s32.totalorder %s142, %s158
      %p160 = scmp.eq.s32.totalorder %s24, 0
      %p161 = por %p159, %p160
      %p162 = scmp.le.s32.totalorder 1, %s18
      %p163 = scmp.lt.s32.totalorder %s18, 3
      %p164 = pnand %p162, %p163
      %p165 = pneg %p164
      // Predicated region
      $region9: #{tpu_custom_call.1} parent=5 // pred_check
        _
      $region10: #{tpu_custom_call.1} parent=5 // pred_check_branch
        %167 = sbr.rel (%p164) target = $region12
      $region11: #{tpu_custom_call.1} parent=5 // pred_region
        %s168 = ssub.s32 %s18, 1
        // Predicated region
        $region13: #{tpu_custom_call.1} parent=11 // pred_check
          %p169 = pneg %p65
        $region14: #{tpu_custom_call.1} parent=11 // pred_check_branch
          %171 = sbr.rel (%p169) target = $region16
        $region15: #{tpu_custom_call.1} parent=11 // pred_region
          %173 = vsyncadd [#allocation6], 0
          %s174 = sshll.u32 %s1, 4
          %s175 = int_to_ptr.hbm [resolvable:$true] %s174
          %s176 = sshll.u32 [#allocation5], 4
          %s177 = int_to_ptr.vmem [resolvable:$true] %s176
          %182 = dma.hbm_to_vmem [thread:$0]  %s175, 3072, %s177, [#allocation6], 64, 64, 4
        $region16: #{tpu_custom_call.1} parent=11 // pred_fallthru
          _
        // Predicated region
        $region17: #{tpu_custom_call.1} parent=11 // pred_check
          %p183 = pneg %p86
        $region18: #{tpu_custom_call.1} parent=11 // pred_check_branch
          %185 = sbr.rel (%p183) target = $region20
        $region19: #{tpu_custom_call.1} parent=11 // pred_region
          _
        $region20: #{tpu_custom_call.1} parent=11 // pred_fallthru
          _
        // Predicated region
        $region21: #{tpu_custom_call.1} parent=11 // pred_check
          %p186 = pneg %p107
        $region22: #{tpu_custom_call.1} parent=11 // pred_check_branch
          %188 = sbr.rel (%p186) target = $region24
        $region23: #{tpu_custom_call.1} parent=11 // pred_region
          %190 = vsyncadd [#allocation6], 0
          %s191 = sshll.u32 %s3, 4
          %s192 = int_to_ptr.hbm [resolvable:$true] %s191
          %s193 = sshll.u32 [#allocation7], 4
          %s194 = int_to_ptr.vmem [resolvable:$true] %s193
          %199 = dma.hbm_to_vmem [thread:$0]  %s192, 3072, %s194, [#allocation6], 64, 64, 4
        $region24: #{tpu_custom_call.1} parent=11 // pred_fallthru
          _
        // Predicated region
        $region25: #{tpu_custom_call.1} parent=11 // pred_check
          %p200 = pneg %p128
        $region26: #{tpu_custom_call.1} parent=11 // pred_check_branch
          %202 = sbr.rel (%p200) target = $region28
        $region27: #{tpu_custom_call.1} parent=11 // pred_region
          _
        $region28: #{tpu_custom_call.1} parent=11 // pred_fallthru
          _
      $region12: #{tpu_custom_call.1} parent=5 // pred_fallthru
        _
      %p203 = scmp.lt.s32.totalorder %s18, 2
      // Predicated region
      $region29: #{tpu_custom_call.1} parent=5 // pred_check
        %p204 = pneg %p203
      $region30: #{tpu_custom_call.1} parent=5 // pred_check_branch
        %206 = sbr.rel (%p204) target = $region32
      $region31: #{tpu_custom_call.1} parent=5 // pred_region
        // Predicated region
        $region33: #{tpu_custom_call.1} parent=31 // pred_check
          %p207 = pneg %p38
        $region34: #{tpu_custom_call.1} parent=31 // pred_check_branch
          %209 = sbr.rel (%p207) target = $region36
        $region35: #{tpu_custom_call.1} parent=31 // pred_region
          %s210 = sand.u32 %s28, 1
          %s211 = scalar_lea.sflag [#allocation3], %s210
          %s212 = sand.u32 %s28, 1
          %s213 = smul.addr %s212, 8
          %s214 = scalar_lea.vmem [#allocation2], %s213
          %s215 = smul.u32 2, %s18
          %217 = vsyncadd %s211, 0
          %s218 = smul.addr %s215, 4
          %s219 = scalar_lea.hbm %s0, %s218
          %s220 = sshll.u32 %s219, 4
          %s221 = int_to_ptr.hbm [resolvable:$true] %s220
          %s222 = sshll.u32 %s214, 4
          %s223 = int_to_ptr.vmem [resolvable:$true] %s222
          %228 = dma.hbm_to_vmem [thread:$0]  %s221, 128, %s223, %s211, 64, 64, 4
        $region36: #{tpu_custom_call.1} parent=31 // pred_fallthru
          _
      $region32: #{tpu_custom_call.1} parent=5 // pred_fallthru
        _
      %p229 = scmp.le.s32.totalorder 1, %s18
      %p230 = scmp.lt.s32.totalorder %s18, 3
      %p231 = pnand %p229, %p230
      %p232 = pneg %p231
      // Predicated region
      $region37: #{tpu_custom_call.1} parent=5 // pred_check
        _
      $region38: #{tpu_custom_call.1} parent=5 // pred_check_branch
        %234 = sbr.rel (%p231) target = $region40
      $region39: #{tpu_custom_call.1} parent=5 // pred_region
        %s235 = ssub.s32 %s18, 1
        %s236 = sand.u32 %s31, 1
        %s237 = scalar_lea.sflag [#allocation3], %s236
        %s238 = sand.u32 %s31, 1
        %s239 = smul.addr %s238, 8
        %s240 = scalar_lea.vmem [#allocation2], %s239
        // Predicated region
        $region41: #{tpu_custom_call.1} parent=39 // pred_check
          %p241 = pneg %p44
        $region42: #{tpu_custom_call.1} parent=39 // pred_check_branch
          %243 = sbr.rel (%p241) target = $region44
        $region43: #{tpu_custom_call.1} parent=39 // pred_region
          %245 = dma.done %s237, 128
        $region44: #{tpu_custom_call.1} parent=39 // pred_fallthru
          _
        // Predicated region
        $region45: #{tpu_custom_call.1} parent=39 // pred_check
          %p246 = pneg %p65
        $region46: #{tpu_custom_call.1} parent=39 // pred_check_branch
          %248 = sbr.rel (%p246) target = $region48
        $region47: #{tpu_custom_call.1} parent=39 // pred_region
          %250 = dma.done [#allocation6], 3072
        $region48: #{tpu_custom_call.1} parent=39 // pred_fallthru
          _
        // Predicated region
        $region49: #{tpu_custom_call.1} parent=39 // pred_check
          %p251 = pneg %p107
        $region50: #{tpu_custom_call.1} parent=39 // pred_check_branch
          %253 = sbr.rel (%p251) target = $region52
        $region51: #{tpu_custom_call.1} parent=39 // pred_region
          %255 = dma.done [#allocation6], 3072
        $region52: #{tpu_custom_call.1} parent=39 // pred_fallthru
          _
        %s256 = sand.u32 %s31, 1
        %s257 = scalar_lea.sflag [#allocation3], %s256
        %s258 = sand.u32 %s31, 1
        %s259 = smul.addr %s258, 8
        %s260 = scalar_lea.vmem [#allocation2], %s259
        %p261 = pneg %p44
        %p262 = pneg %p41
        %p263 = pneg %p65
        %p264 = pneg %p62
        %p265 = pneg %p86
        %p266 = pneg %p83
        %p267 = pneg %p107
        %p268 = pneg %p104
        %p269 = pneg %p128
        %p270 = pneg %p125
        %p271 = pneg %p154
        %p272 = pneg %p151
        %s273 = sand.u32 %s141, 1
        %s274 = scalar_lea.sflag [#allocation4], %s273
        %s275 = sand.u32 %s141, 1
        %s276 = smul.addr %s275, 16
        %s277 = scalar_lea.vmem [#allocation8], %s276
        %s278 = smul.u32 2, %s23
        %s279 = smul.u32 2, %s23
        %v280 = vld [vmem:[%s240] sm:$0xf]
        %v281 = vld [vmem:[%s240 + $0x4] sm:$0xf]
        %v282 = vlaneseq
        %v283 = vshrl.u32 %v282, 7
        %v284 = vadd.s32 %v283, 8
        %vm285 = vcmp.lt.s32.totalorder %v283, 0
        %v286 = vsub.s32 0, %v283
        %v287 = vsel %vm285, %v286, %v283
        %v288 = vshrl.u32 %v287, 4
        %v289 = vand.u32 %v287, 15
        %v290 = vsub.s32 0, %v289
        %v291 = vsel %vm285, %v290, %v289
        %vm292 = vcmp.lt.s32.totalorder %v284, 0
        %v293 = vsub.s32 0, %v284
        %v294 = vsel %vm292, %v293, %v284
        %v295 = vshrl.u32 %v294, 4
        %v296 = vand.u32 %v294, 15
        %v297 = vsub.s32 0, %v296
        %v298 = vsel %vm292, %v297, %v296
        %vm299 = vcmp.ne.s32.totalorder %v291, 0
        %vm300 = vcmp.ne.s32.totalorder %v298, 0
        %vm301 = vcmp.lt.s32.totalorder %v291, 0
        %vm302 = vcmp.lt.s32.totalorder %v298, 0
        %vm303 = vmand %vm301, %vm299
        %vm304 = vmand %vm302, %vm300
        %v305 = vadd.s32 %v291, 16
        %v306 = vadd.s32 %v298, 16
        %v307 = vsel %vm303, %v305, %v291
        %v308 = vsel %vm304, %v306, %v298
        %vm309 = vcmp.gt.s32.totalorder %v307, 0
        %vm310 = vcmp.gt.s32.totalorder %v308, 0
        %v311 = vsel %vm309, 1, 0
        %v312 = vsel %vm310, 1, 0
        %v313 = vcvt.s32.f32 %v311
        %v314 = vcvt.s32.f32 %v312
        %vm315 = vcmp.lt.s32.totalorder %v307, 15
        %vm316 = vcmp.lt.s32.totalorder %v308, 15
        %v317 = vsel %vm315, 1, 0
        %v318 = vsel %vm316, 1, 0
        %v319 = vcvt.s32.f32 %v317
        %v320 = vcvt.s32.f32 %v318
        %v321 = vld [vmem:[#allocation5] sm:$0xf]
        %v322 = vld [vmem:[#allocation5 + $0x4] sm:$0xf]
        %v323 = vld [vmem:[#allocation5 + $0x8] sm:$0xf]
        %v324 = vld [vmem:[#allocation5 + $0xc] sm:$0xf]
        %v325 = vld [vmem:[#allocation5 + $0x10] sm:$0xf]
        %v326 = vld [vmem:[#allocation5 + $0x14] sm:$0xf]
        %v327 = vld [vmem:[#allocation5 + $0x18] sm:$0xf]
        %v328 = vld [vmem:[#allocation5 + $0x1c] sm:$0xf]
        %v329 = vld [vmem:[#allocation5 + $0x20] sm:$0xf]
        %v330 = vld [vmem:[#allocation5 + $0x24] sm:$0xf]
        %v331 = vld [vmem:[#allocation5 + $0x28] sm:$0xf]
        %v332 = vld [vmem:[#allocation5 + $0x2c] sm:$0xf]
        %v333 = vld [vmem:[#allocation5 + $0x30] sm:$0xf]
        %v334 = vld [vmem:[#allocation5 + $0x34] sm:$0xf]
        %v335 = vld [vmem:[#allocation5 + $0x38] sm:$0xf]
        %v336 = vld [vmem:[#allocation5 + $0x3c] sm:$0xf]
        %v339 = vunpack.c.l.b16 %v280
        %v340 = vunpack.c.l.b16 %v281
        %v341 = vpack.c.b16 %v340, %v339
        %v359 = vunpack.c.l.b16 %v321
        %v360 = vunpack.c.l.b16 %v322
        %v361 = vunpack.c.l.b16 %v323
        %v362 = vunpack.c.l.b16 %v324
        %v363 = vunpack.c.l.b16 %v325
        %v364 = vunpack.c.l.b16 %v326
        %v365 = vunpack.c.l.b16 %v327
        %v366 = vunpack.c.l.b16 %v328
        %v367 = vunpack.c.l.b16 %v329
        %v368 = vunpack.c.l.b16 %v330
        %v369 = vunpack.c.l.b16 %v331
        %v370 = vunpack.c.l.b16 %v332
        %v371 = vunpack.c.l.b16 %v333
        %v372 = vunpack.c.l.b16 %v334
        %v373 = vunpack.c.l.b16 %v335
        %v374 = vunpack.c.l.b16 %v336
        %v375 = vpack.c.b16 %v360, %v359
        %v376 = vpack.c.b16 %v362, %v361
        %v377 = vpack.c.b16 %v364, %v363
        %v378 = vpack.c.b16 %v366, %v365
        %v379 = vpack.c.b16 %v368, %v367
        %v380 = vpack.c.b16 %v370, %v369
        %v381 = vpack.c.b16 %v372, %v371
        %v382 = vpack.c.b16 %v374, %v373
        %391 = vmatpush.bf16.msra.mxu0 %v382
        %392 = vmatpush.bf16.msra.mxu0 %v381
        %393 = vmatpush.bf16.msra.mxu0 %v380
        %394 = vmatpush.bf16.msra.mxu0 %v379
        %395 = vmatpush.bf16.msra.mxu0 %v378
        %396 = vmatpush.bf16.msra.mxu0 %v377
        %397 = vmatpush.bf16.msra.mxu0 %v376
        %398 = vmatpush.bf16.msra.mxu0 %v375
        %399 = vmatmul.bf16.gmra.mxu0 %v341
        %v400 = vpop.f32.mrf.mxu0
        %v401 = vadd.f32 0.0, %v400
        %v402 = vpop.f32.mrf.mxu0
        %v403 = vadd.f32 0.0, %v402
        %404 = vdwg.mxu0
        %s405 = scalar_lea.vmem [#allocation5], 64
        %v406 = vld [vmem:[%s405] sm:$0xf]
        %v407 = vld [vmem:[%s405 + $0x4] sm:$0xf]
        %v408 = vld [vmem:[%s405 + $0x8] sm:$0xf]
        %v409 = vld [vmem:[%s405 + $0xc] sm:$0xf]
        %v410 = vld [vmem:[%s405 + $0x10] sm:$0xf]
        %v411 = vld [vmem:[%s405 + $0x14] sm:$0xf]
        %v412 = vld [vmem:[%s405 + $0x18] sm:$0xf]
        %v413 = vld [vmem:[%s405 + $0x1c] sm:$0xf]
        %v414 = vld [vmem:[%s405 + $0x20] sm:$0xf]
        %v415 = vld [vmem:[%s405 + $0x24] sm:$0xf]
        %v416 = vld [vmem:[%s405 + $0x28] sm:$0xf]
        %v417 = vld [vmem:[%s405 + $0x2c] sm:$0xf]
        %v418 = vld [vmem:[%s405 + $0x30] sm:$0xf]
        %v419 = vld [vmem:[%s405 + $0x34] sm:$0xf]
        %v420 = vld [vmem:[%s405 + $0x38] sm:$0xf]
        %v421 = vld [vmem:[%s405 + $0x3c] sm:$0xf]
        %s422 = scalar_lea.vmem [#allocation5], 128
        %v423 = vld [vmem:[%s422] sm:$0xf]
        %v424 = vld [vmem:[%s422 + $0x4] sm:$0xf]
        %v425 = vld [vmem:[%s422 + $0x8] sm:$0xf]
        %v426 = vld [vmem:[%s422 + $0xc] sm:$0xf]
        %v427 = vld [vmem:[%s422 + $0x10] sm:$0xf]
        %v428 = vld [vmem:[%s422 + $0x14] sm:$0xf]
        %v429 = vld [vmem:[%s422 + $0x18] sm:$0xf]
        %v430 = vld [vmem:[%s422 + $0x1c] sm:$0xf]
        %v431 = vld [vmem:[%s422 + $0x20] sm:$0xf]
        %v432 = vld [vmem:[%s422 + $0x24] sm:$0xf]
        %v433 = vld [vmem:[%s422 + $0x28] sm:$0xf]
        %v434 = vld [vmem:[%s422 + $0x2c] sm:$0xf]
        %v435 = vld [vmem:[%s422 + $0x30] sm:$0xf]
        %v436 = vld [vmem:[%s422 + $0x34] sm:$0xf]
        %v437 = vld [vmem:[%s422 + $0x38] sm:$0xf]
        %v438 = vld [vmem:[%s422 + $0x3c] sm:$0xf]
        %v455 = vunpack.c.l.b16 %v423
        %v456 = vunpack.c.l.b16 %v424
        %v457 = vunpack.c.l.b16 %v425
        %v458 = vunpack.c.l.b16 %v426
        %v459 = vunpack.c.l.b16 %v427
        %v460 = vunpack.c.l.b16 %v428
        %v461 = vunpack.c.l.b16 %v429
        %v462 = vunpack.c.l.b16 %v430
        %v463 = vunpack.c.l.b16 %v431
        %v464 = vunpack.c.l.b16 %v432
        %v465 = vunpack.c.l.b16 %v433
        %v466 = vunpack.c.l.b16 %v434
        %v467 = vunpack.c.l.b16 %v435
        %v468 = vunpack.c.l.b16 %v436
        %v469 = vunpack.c.l.b16 %v437
        %v470 = vunpack.c.l.b16 %v438
        %v471 = vpack.c.b16 %v456, %v455
        %v472 = vpack.c.b16 %v458, %v457
        %v473 = vpack.c.b16 %v460, %v459
        %v474 = vpack.c.b16 %v462, %v461
        %v475 = vpack.c.b16 %v464, %v463
        %v476 = vpack.c.b16 %v466, %v465
        %v477 = vpack.c.b16 %v468, %v467
        %v478 = vpack.c.b16 %v470, %v469
        %487 = vmatpush.bf16.msra.mxu0 %v478
        %488 = vmatpush.bf16.msra.mxu0 %v477
        %489 = vmatpush.bf16.msra.mxu0 %v476
        %490 = vmatpush.bf16.msra.mxu0 %v475
        %491 = vmatpush.bf16.msra.mxu0 %v474
        %492 = vmatpush.bf16.msra.mxu0 %v473
        %493 = vmatpush.bf16.msra.mxu0 %v472
        %494 = vmatpush.bf16.msra.mxu0 %v471
        %495 = vmatmul.bf16.gmra.mxu0 %v341
        %v496 = vpop.f32.mrf.mxu0
        %v497 = vadd.f32 0.0, %v496
        %v498 = vpop.f32.mrf.mxu0
        %v499 = vadd.f32 0.0, %v498
        %500 = vdwg.mxu0
        %vm503 = vcmask 1040384
        %v504 = vrot.slane %v401, 7
        %v505 = vrot.slane %v403, 7
        %v506 = vsel %vm503, %v504, %v505
        %v509 = vsel %vm503, 0.0, %v504
        %vm512 = vcmask 1046528
        %v513 = vrot.slane %v497, 1
        %v514 = vrot.slane %v499, 1
        %v515 = vsel %vm512, %v513, %v514
        %v518 = vsel %vm512, %v514, 0.0
        %v519 = vmul.f32 %v313, %v509
        %v520 = vmul.f32 %v314, %v506
        %v537 = vunpack.c.l.b16 %v406
        %v538 = vunpack.c.l.b16 %v407
        %v539 = vunpack.c.l.b16 %v408
        %v540 = vunpack.c.l.b16 %v409
        %v541 = vunpack.c.l.b16 %v410
        %v542 = vunpack.c.l.b16 %v411
        %v543 = vunpack.c.l.b16 %v412
        %v544 = vunpack.c.l.b16 %v413
        %v545 = vunpack.c.l.b16 %v414
        %v546 = vunpack.c.l.b16 %v415
        %v547 = vunpack.c.l.b16 %v416
        %v548 = vunpack.c.l.b16 %v417
        %v549 = vunpack.c.l.b16 %v418
        %v550 = vunpack.c.l.b16 %v419
        %v551 = vunpack.c.l.b16 %v420
        %v552 = vunpack.c.l.b16 %v421
        %v553 = vpack.c.b16 %v538, %v537
        %v554 = vpack.c.b16 %v540, %v539
        %v555 = vpack.c.b16 %v542, %v541
        %v556 = vpack.c.b16 %v544, %v543
        %v557 = vpack.c.b16 %v546, %v545
        %v558 = vpack.c.b16 %v548, %v547
        %v559 = vpack.c.b16 %v550, %v549
        %v560 = vpack.c.b16 %v552, %v551
        %569 = vmatpush.bf16.msra.mxu0 %v560
        %570 = vmatpush.bf16.msra.mxu0 %v559
        %571 = vmatpush.bf16.msra.mxu0 %v558
        %572 = vmatpush.bf16.msra.mxu0 %v557
        %573 = vmatpush.bf16.msra.mxu0 %v556
        %574 = vmatpush.bf16.msra.mxu0 %v555
        %575 = vmatpush.bf16.msra.mxu0 %v554
        %576 = vmatpush.bf16.msra.mxu0 %v553
        %577 = vmatmul.bf16.gmra.mxu0 %v341
        %v578 = vpop.f32.mrf.mxu0
        %v579 = vadd.f32 %v519, %v578
        %v580 = vpop.f32.mrf.mxu0
        %v581 = vadd.f32 %v520, %v580
        %582 = vdwg.mxu0
        %v583 = vmul.f32 %v319, %v515
        %v584 = vmul.f32 %v320, %v518
        %v585 = vadd.f32 %v579, %v583
        %v586 = vadd.f32 %v581, %v584
        %v587 = vld [vmem:[%s2] sm:$0x1]
        %v589 = vperm.slane %v587, 0
        %v591 = vadd.f32 %v585, %v589
        %v592 = vadd.f32 %v586, %v589
        %v593 = vmax.f32 %v591, 0.0
        %v594 = vmax.f32 %v592, 0.0
        %v595 = vpack.c.bf16 %v594, %v593
        %v596 = vld [vmem:[#allocation7] sm:$0xf]
        %v597 = vld [vmem:[#allocation7 + $0x4] sm:$0xf]
        %v598 = vld [vmem:[#allocation7 + $0x8] sm:$0xf]
        %v599 = vld [vmem:[#allocation7 + $0xc] sm:$0xf]
        %v600 = vld [vmem:[#allocation7 + $0x10] sm:$0xf]
        %v601 = vld [vmem:[#allocation7 + $0x14] sm:$0xf]
        %v602 = vld [vmem:[#allocation7 + $0x18] sm:$0xf]
        %v603 = vld [vmem:[#allocation7 + $0x1c] sm:$0xf]
        %v604 = vld [vmem:[#allocation7 + $0x20] sm:$0xf]
        %v605 = vld [vmem:[#allocation7 + $0x24] sm:$0xf]
        %v606 = vld [vmem:[#allocation7 + $0x28] sm:$0xf]
        %v607 = vld [vmem:[#allocation7 + $0x2c] sm:$0xf]
        %v608 = vld [vmem:[#allocation7 + $0x30] sm:$0xf]
        %v609 = vld [vmem:[#allocation7 + $0x34] sm:$0xf]
        %v610 = vld [vmem:[#allocation7 + $0x38] sm:$0xf]
        %v611 = vld [vmem:[#allocation7 + $0x3c] sm:$0xf]
        %v628 = vunpack.c.l.b16 %v596
        %v629 = vunpack.c.l.b16 %v597
        %v630 = vunpack.c.l.b16 %v598
        %v631 = vunpack.c.l.b16 %v599
        %v632 = vunpack.c.l.b16 %v600
        %v633 = vunpack.c.l.b16 %v601
        %v634 = vunpack.c.l.b16 %v602
        %v635 = vunpack.c.l.b16 %v603
        %v636 = vunpack.c.l.b16 %v604
        %v637 = vunpack.c.l.b16 %v605
        %v638 = vunpack.c.l.b16 %v606
        %v639 = vunpack.c.l.b16 %v607
        %v640 = vunpack.c.l.b16 %v608
        %v641 = vunpack.c.l.b16 %v609
        %v642 = vunpack.c.l.b16 %v610
        %v643 = vunpack.c.l.b16 %v611
        %v644 = vpack.c.b16 %v629, %v628
        %v645 = vpack.c.b16 %v631, %v630
        %v646 = vpack.c.b16 %v633, %v632
        %v647 = vpack.c.b16 %v635, %v634
        %v648 = vpack.c.b16 %v637, %v636
        %v649 = vpack.c.b16 %v639, %v638
        %v650 = vpack.c.b16 %v641, %v640
        %v651 = vpack.c.b16 %v643, %v642
        %660 = vmatpush.bf16.msra.mxu0 %v651
        %661 = vmatpush.bf16.msra.mxu0 %v650
        %662 = vmatpush.bf16.msra.mxu0 %v649
        %663 = vmatpush.bf16.msra.mxu0 %v648
        %664 = vmatpush.bf16.msra.mxu0 %v647
        %665 = vmatpush.bf16.msra.mxu0 %v646
        %666 = vmatpush.bf16.msra.mxu0 %v645
        %667 = vmatpush.bf16.msra.mxu0 %v644
        %668 = vmatmul.bf16.gmra.mxu0 %v595
        %v669 = vpop.f32.mrf.mxu0
        %v670 = vadd.f32 0.0, %v669
        %v671 = vpop.f32.mrf.mxu0
        %v672 = vadd.f32 0.0, %v671
        %673 = vdwg.mxu0
        %s674 = scalar_lea.vmem [#allocation7], 64
        %v675 = vld [vmem:[%s674] sm:$0xf]
        %v676 = vld [vmem:[%s674 + $0x4] sm:$0xf]
        %v677 = vld [vmem:[%s674 + $0x8] sm:$0xf]
        %v678 = vld [vmem:[%s674 + $0xc] sm:$0xf]
        %v679 = vld [vmem:[%s674 + $0x10] sm:$0xf]
        %v680 = vld [vmem:[%s674 + $0x14] sm:$0xf]
        %v681 = vld [vmem:[%s674 + $0x18] sm:$0xf]
        %v682 = vld [vmem:[%s674 + $0x1c] sm:$0xf]
        %v683 = vld [vmem:[%s674 + $0x20] sm:$0xf]
        %v684 = vld [vmem:[%s674 + $0x24] sm:$0xf]
        %v685 = vld [vmem:[%s674 + $0x28] sm:$0xf]
        %v686 = vld [vmem:[%s674 + $0x2c] sm:$0xf]
        %v687 = vld [vmem:[%s674 + $0x30] sm:$0xf]
        %v688 = vld [vmem:[%s674 + $0x34] sm:$0xf]
        %v689 = vld [vmem:[%s674 + $0x38] sm:$0xf]
        %v690 = vld [vmem:[%s674 + $0x3c] sm:$0xf]
        %s691 = scalar_lea.vmem [#allocation7], 128
        %v692 = vld [vmem:[%s691] sm:$0xf]
        %v693 = vld [vmem:[%s691 + $0x4] sm:$0xf]
        %v694 = vld [vmem:[%s691 + $0x8] sm:$0xf]
        %v695 = vld [vmem:[%s691 + $0xc] sm:$0xf]
        %v696 = vld [vmem:[%s691 + $0x10] sm:$0xf]
        %v697 = vld [vmem:[%s691 + $0x14] sm:$0xf]
        %v698 = vld [vmem:[%s691 + $0x18] sm:$0xf]
        %v699 = vld [vmem:[%s691 + $0x1c] sm:$0xf]
        %v700 = vld [vmem:[%s691 + $0x20] sm:$0xf]
        %v701 = vld [vmem:[%s691 + $0x24] sm:$0xf]
        %v702 = vld [vmem:[%s691 + $0x28] sm:$0xf]
        %v703 = vld [vmem:[%s691 + $0x2c] sm:$0xf]
        %v704 = vld [vmem:[%s691 + $0x30] sm:$0xf]
        %v705 = vld [vmem:[%s691 + $0x34] sm:$0xf]
        %v706 = vld [vmem:[%s691 + $0x38] sm:$0xf]
        %v707 = vld [vmem:[%s691 + $0x3c] sm:$0xf]
        %v724 = vunpack.c.l.b16 %v692
        %v725 = vunpack.c.l.b16 %v693
        %v726 = vunpack.c.l.b16 %v694
        %v727 = vunpack.c.l.b16 %v695
        %v728 = vunpack.c.l.b16 %v696
        %v729 = vunpack.c.l.b16 %v697
        %v730 = vunpack.c.l.b16 %v698
        %v731 = vunpack.c.l.b16 %v699
        %v732 = vunpack.c.l.b16 %v700
        %v733 = vunpack.c.l.b16 %v701
        %v734 = vunpack.c.l.b16 %v702
        %v735 = vunpack.c.l.b16 %v703
        %v736 = vunpack.c.l.b16 %v704
        %v737 = vunpack.c.l.b16 %v705
        %v738 = vunpack.c.l.b16 %v706
        %v739 = vunpack.c.l.b16 %v707
        %v740 = vpack.c.b16 %v725, %v724
        %v741 = vpack.c.b16 %v727, %v726
        %v742 = vpack.c.b16 %v729, %v728
        %v743 = vpack.c.b16 %v731, %v730
        %v744 = vpack.c.b16 %v733, %v732
        %v745 = vpack.c.b16 %v735, %v734
        %v746 = vpack.c.b16 %v737, %v736
        %v747 = vpack.c.b16 %v739, %v738
        %756 = vmatpush.bf16.msra.mxu0 %v747
        %757 = vmatpush.bf16.msra.mxu0 %v746
        %758 = vmatpush.bf16.msra.mxu0 %v745
        %759 = vmatpush.bf16.msra.mxu0 %v744
        %760 = vmatpush.bf16.msra.mxu0 %v743
        %761 = vmatpush.bf16.msra.mxu0 %v742
        %762 = vmatpush.bf16.msra.mxu0 %v741
        %763 = vmatpush.bf16.msra.mxu0 %v740
        %764 = vmatmul.bf16.gmra.mxu0 %v595
        %v765 = vpop.f32.mrf.mxu0
        %v766 = vadd.f32 0.0, %v765
        %v767 = vpop.f32.mrf.mxu0
        %v768 = vadd.f32 0.0, %v767
        %769 = vdwg.mxu0
        %v772 = vrot.slane %v670, 7
        %v773 = vrot.slane %v672, 7
        %v774 = vsel %vm503, %v772, %v773
        %v777 = vsel %vm503, 0.0, %v772
        %v780 = vrot.slane %v766, 1
        %v781 = vrot.slane %v768, 1
        %v782 = vsel %vm512, %v780, %v781
        %v785 = vsel %vm512, %v781, 0.0
        %v786 = vmul.f32 %v313, %v777
        %v787 = vmul.f32 %v314, %v774
        %v804 = vunpack.c.l.b16 %v675
        %v805 = vunpack.c.l.b16 %v676
        %v806 = vunpack.c.l.b16 %v677
        %v807 = vunpack.c.l.b16 %v678
        %v808 = vunpack.c.l.b16 %v679
        %v809 = vunpack.c.l.b16 %v680
        %v810 = vunpack.c.l.b16 %v681
        %v811 = vunpack.c.l.b16 %v682
        %v812 = vunpack.c.l.b16 %v683
        %v813 = vunpack.c.l.b16 %v684
        %v814 = vunpack.c.l.b16 %v685
        %v815 = vunpack.c.l.b16 %v686
        %v816 = vunpack.c.l.b16 %v687
        %v817 = vunpack.c.l.b16 %v688
        %v818 = vunpack.c.l.b16 %v689
        %v819 = vunpack.c.l.b16 %v690
        %v820 = vpack.c.b16 %v805, %v804
        %v821 = vpack.c.b16 %v807, %v806
        %v822 = vpack.c.b16 %v809, %v808
        %v823 = vpack.c.b16 %v811, %v810
        %v824 = vpack.c.b16 %v813, %v812
        %v825 = vpack.c.b16 %v815, %v814
        %v826 = vpack.c.b16 %v817, %v816
        %v827 = vpack.c.b16 %v819, %v818
        %836 = vmatpush.bf16.msra.mxu0 %v827
        %837 = vmatpush.bf16.msra.mxu0 %v826
        %838 = vmatpush.bf16.msra.mxu0 %v825
        %839 = vmatpush.bf16.msra.mxu0 %v824
        %840 = vmatpush.bf16.msra.mxu0 %v823
        %841 = vmatpush.bf16.msra.mxu0 %v822
        %842 = vmatpush.bf16.msra.mxu0 %v821
        %843 = vmatpush.bf16.msra.mxu0 %v820
        %844 = vmatmul.bf16.gmra.mxu0 %v595
        %v845 = vpop.f32.mrf.mxu0
        %v846 = vadd.f32 %v786, %v845
        %v847 = vpop.f32.mrf.mxu0
        %v848 = vadd.f32 %v787, %v847
        %849 = vdwg.mxu0
        %v850 = vmul.f32 %v319, %v782
        %v851 = vmul.f32 %v320, %v785
        %v852 = vadd.f32 %v846, %v850
        %v853 = vadd.f32 %v848, %v851
        %v854 = vld [vmem:[%s4] sm:$0x1]
        %v856 = vperm.slane %v854, 0
        %v858 = vadd.f32 %v852, %v856
        %v859 = vadd.f32 %v853, %v856
        %v860 = vunpack.c.l.bf16 %v280
        %v861 = vunpack.c.l.bf16 %v281
        %v862 = vadd.f32 %v860, %v858
        %v863 = vadd.f32 %v861, %v859
        %v864 = vmax.f32 %v862, 0.0
        %v865 = vmax.f32 %v863, 0.0
        %866 = vst [vmem:[%s277] sm:$0xff] %v864
        %867 = vst [vmem:[%s277 + $0x8] sm:$0xff] %v865
        %s868 = sand.u32 %s141, 1
        %s869 = scalar_lea.sflag [#allocation4], %s868
        %s870 = sand.u32 %s141, 1
        %s871 = smul.addr %s870, 16
        %s872 = scalar_lea.vmem [#allocation8], %s871
        // Predicated region
        $region53: #{tpu_custom_call.1} parent=39 // pred_check
          %p873 = pneg %p151
        $region54: #{tpu_custom_call.1} parent=39 // pred_check_branch
          %875 = sbr.rel (%p873) target = $region56
        $region55: #{tpu_custom_call.1} parent=39 // pred_region
          %s876 = smul.u32 2, %s23
          %878 = vsyncadd %s869, 0
          %s879 = smul.addr %s876, 8
          %s880 = scalar_lea.hbm %s5, %s879
          %s881 = sshll.u32 %s872, 4
          %s882 = int_to_ptr.vmem [resolvable:$true] %s881
          %s883 = sshll.u32 %s880, 4
          %s884 = int_to_ptr.hbm [resolvable:$true] %s883
          %889 = dma.vmem_to_hbm [thread:$0]  %s882, 256, %s884, %s869, 128, 128, 8
        $region56: #{tpu_custom_call.1} parent=39 // pred_fallthru
          _
      $region40: #{tpu_custom_call.1} parent=5 // pred_fallthru
        _
      %p890 = scmp.le.s32.totalorder 2, %s18
      // Predicated region
      $region57: #{tpu_custom_call.1} parent=5 // pred_check
        %p891 = pneg %p890
      $region58: #{tpu_custom_call.1} parent=5 // pred_check_branch
        %893 = sbr.rel (%p891) target = $region60
      $region59: #{tpu_custom_call.1} parent=5 // pred_region
        %s894 = ssub.s32 %s18, 2
        // Predicated region
        $region61: #{tpu_custom_call.1} parent=59 // pred_check
          %p895 = pneg %p157
        $region62: #{tpu_custom_call.1} parent=59 // pred_check_branch
          %897 = sbr.rel (%p895) target = $region64
        $region63: #{tpu_custom_call.1} parent=59 // pred_region
          %s898 = sand.u32 %s142, 1
          %s899 = scalar_lea.sflag [#allocation4], %s898
          %s900 = sand.u32 %s142, 1
          %s901 = smul.addr %s900, 16
          %s902 = scalar_lea.vmem [#allocation8], %s901
          %904 = dma.done %s899, 256
        $region64: #{tpu_custom_call.1} parent=59 // pred_fallthru
          _
      $region60: #{tpu_custom_call.1} parent=5 // pred_fallthru
        _
    $region6: #{tpu_custom_call.1} parent=1 // loop_footer
      %s22 = sadd.s32 1, %s18
    $region7: #{tpu_custom_call.1} parent=1 // loop_footer_branch
      %17 = sbr.rel target = $region3
    $region8: #{tpu_custom_call.1} parent=1 // loop_exit
      _
    %905 = vsyncpa [#allocation3], 1
    %s906 = scalar_lea.sflag [#allocation3], 1
    %907 = vsyncpa %s906, 1
    %908 = vsyncpa [#allocation6], 1
    %909 = vsyncpa [#allocation4], 1
    %s910 = scalar_lea.sflag [#allocation4], 1
    %911 = vsyncpa %s910, 1

</llo_original>
